<compile_context>
chip_gen: v7x
topology: tpu7x:2x2x1
jax: 0.10.0
libtpu: 0.0.40
codegen_flags: <defaults>
</compile_context>

<pallas_src>
import math

import jax
import jax.numpy as jnp
import numpy as np
from jax import lax
from jax.experimental import pallas as pl
from jax.experimental.pallas import tpu as pltpu

# ----------------------------- configuration (module __init__ kwargs) -----------------------
VAR_NUMS = (3, 5)            # var_nums -> group_num = 2, metric_num = 8
BATCH = 2
WINDOW = 16                  # kwargs['window_size']
T_HIDDEN = (8, 8)            # kwargs['temporal_hidden_sizes']
T_KERNELS = (3, 3)           # kwargs['temporal_kernel_sizes']
I_HIDDEN = (16, 32)          # kwargs['inner_hidden_sizes'] (last forced to hidden_size)
I_KERNELS = (3, 3)           # kwargs['inner_kernel_sizes']
HIDDEN_SIZE = 32             # kwargs['hidden_size']
DILATION = 2                 # ConvNet default: dilation_size = 2 ** layer_idx
POOLING = True               # kwargs['pooling'] -> temporal_dim = 1 (MaxPool1d over channels)

GROUP_NUM = len(VAR_NUMS)
C_IN = sum(VAR_NUMS)
N_T_LAYERS = len(T_KERNELS)
N_I_LAYERS = len(I_KERNELS)
T_OUT_PER_GROUP = T_HIDDEN[-1]
TEMPORAL_DIM = 1 if POOLING else T_HIDDEN[-1]


# ------------------------- static packed-weight-slab layout ---------------------------------
def _round8(n):
    return -(-n // 8) * 8


def _build_layout():
    """Per-layer conv descriptors (fused network) + the (rows, 128) slab layout.

    Each layer owns a lane range [col, col+cout): tap k's (cin, cout) matrix sits at rows
    [k*cin_pad, k*cin_pad+cin) of that lane range (unfilled rows stay zero), the bias lives
    on the shared BIAS_ROW.  This lets the kernel do ONE fused (n, K*cin_pad) x (K*cin_pad,
    cout) matmul per layer with purely static slices.
    """
    layers = []
    col = 0
    # fused temporal stack: block-diagonal over the KPI groups (Cin = 3+5, Cout = 2*8)
    cin = C_IN
    for li, (cout_g, k) in enumerate(zip(T_HIDDEN, T_KERNELS)):
        cout = cout_g * GROUP_NUM
        layers.append(dict(stage="t", li=li, cin=cin, cin_pad=_round8(cin),
                           cout=cout, k=k, dil=DILATION ** li, col=col))
        col += cout
        cin = cout
    # inner stack
    cin = GROUP_NUM * TEMPORAL_DIM
    i_hidden = list(I_HIDDEN)
    i_hidden[-1] = HIDDEN_SIZE                       # InnerEncoder forces last -> hidden_size
    for li, (cout, k) in enumerate(zip(i_hidden, I_KERNELS)):
        layers.append(dict(stage="i", li=li, cin=cin, cin_pad=_round8(cin),
                           cout=cout, k=k, dil=DILATION ** li, col=col))
        col += cout
        cin = cout

    slab_cols = 128
    assert col <= slab_cols, "layer output channels do not fit one 128-lane slab"
    w_rows = _round8(max(d["k"] * d["cin_pad"] for d in layers))
    bias_row = w_rows
    slab_rows = _round8(bias_row + 1)
    shifts = sorted({(d["k"] - 1 - kk) * d["dil"] for d in layers for kk in range(d["k"])} - {0})
    assert max(shifts) < WINDOW, "causal shift must stay inside one window (roll+mask scheme)"
    return layers, bias_row, slab_rows, slab_cols, tuple(shifts)


LAYOUT, BIAS_ROW, SLAB_ROWS, SLAB_COLS, SHIFTS = _build_layout()
_INNER0 = next(d for d in LAYOUT if d["stage"] == "i" and d["li"] == 0)
INNER0_PAD = _INNER0["cin_pad"] - _INNER0["cin"]     # zero lanes appended after the group pools


# ----------------------------------- in-kernel compute --------------------------------------
def kpi_kernel(x_ref, w_ref, out_ref):
    """x_ref: (B*W, C_IN), w_ref: (SLAB_ROWS, 128) packed weights, out_ref: (B*W, HIDDEN)."""
    x = x_ref[...]
    n = x.shape[0]

    # time index inside each window (batch folded along rows).  Rows whose in-window index is
    # < shift are zeroed after the roll, which both enforces causal (left) zero padding and
    # stops the roll from reading across batch-element boundaries.  Hoisted: only SHIFTS occur.
    t_in_win = lax.broadcasted_iota(jnp.int32, (n, 1), 0) % WINDOW
    masks = {s: t_in_win >= s for s in SHIFTS}

    def conv_relu(h, d):
        """Causal dilated Conv1d (+Chomp1d) + ReLU; Dropout = identity.

        All K taps fused into one matmul: h must be (n, cin_pad); the lane-concat of the
        masked rolled copies lines up with the tap row-blocks of the weight slab.
        """
        cin_pad, cout, K, dil, col = d["cin_pad"], d["cout"], d["k"], d["dil"], d["col"]
        parts = []
        for k in range(K):
            shift = (K - 1 - k) * dil                          # static python int
            if shift == 0:
                parts.append(h)
            else:
                h_sh = pltpu.roll(h, shift, axis=0)            # h_sh[t] = h[t - shift] (wrapped)
                parts.append(jnp.where(masks[shift], h_sh, 0.0))
        h_cat = parts[0] if K == 1 else jnp.concatenate(parts, axis=1)   # (n, K*cin_pad)
        w = w_ref[0:K * cin_pad, col:col + cout]               # static (K*cin_pad, cout) slice
        b = w_ref[BIAS_ROW:BIAS_ROW + 1, col:col + cout]       # (1, cout)
        acc = jnp.dot(h_cat, w, preferred_element_type=jnp.float32)
        return jnp.maximum(acc + b, 0.0)

    # --- fused TemporalEncoders (block-diagonal weights over the 2 KPI groups) ---------------
    h = x
    for d in LAYOUT:
        if d["stage"] == "t":
            h = conv_relu(h, d)

    # --- per-group nn.MaxPool1d over channels -> 8-lane-padded block for the inner stack -----
    if POOLING:
        pools = [jnp.max(h[:, g * T_OUT_PER_GROUP:(g + 1) * T_OUT_PER_GROUP],
                         axis=1, keepdims=True) for g in range(GROUP_NUM)]
        if INNER0_PAD:
            pools.append(jnp.zeros((n, INNER0_PAD), jnp.float32))
        z = jnp.concatenate(pools, axis=1)                     # (B*W, cin_pad of inner layer 0)
    else:
        z = h

    # --- torch.cat(group_encodings, dim=-1) -> InnerEncoder (pooling=False) ------------------
    for d in LAYOUT:
        if d["stage"] == "i":
            z = conv_relu(z, d)
    out_ref[...] = z.astype(out_ref.dtype)                     # (B*W, HIDDEN_SIZE)


# -------------------------------------- wrapper ----------------------------------------------
def build_weight_slab(params):
    """Pack all conv weights/biases (torch layout (Cout, Cin, K)) into one (SLAB_ROWS, 128) slab.

    Call ONCE at parameter-init/load time and reuse the returned device array across forwards.
    """
    slab = np.zeros((SLAB_ROWS, SLAB_COLS), np.float32)
    by_key = {(d["stage"], d["li"]): d for d in LAYOUT}

    def put(d, w_kio, b):                                     # w_kio: (K, cin, cout), b: (cout,)
        cin, cout, col, cin_pad = d["cin"], d["cout"], d["col"], d["cin_pad"]
        for k in range(d["k"]):
            slab[k * cin_pad:k * cin_pad + cin, col:col + cout] = w_kio[k]
        slab[BIAS_ROW, col:col + cout] = b

    # fused (block-diagonal) temporal weights: group g maps its own in/out channel segment
    for li in range(N_T_LAYERS):
        d = by_key[("t", li)]
        w_f = np.zeros((d["k"], d["cin"], d["cout"]), np.float32)
        b_f = np.zeros((d["cout"],), np.float32)
        ci = co = 0
        for g in range(GROUP_NUM):
            w, b = params["temporal"][g][li]
            w_kio = np.transpose(np.asarray(w), (2, 1, 0))    # (Cout,Cin,K) -> (K,Cin,Cout)
            cin_g, cout_g = w_kio.shape[1], w_kio.shape[2]
            w_f[:, ci:ci + cin_g, co:co + cout_g] = w_kio
            b_f[co:co + cout_g] = np.asarray(b)
            ci += cin_g
            co += cout_g
        put(d, w_f, b_f)

    for li in range(N_I_LAYERS):
        d = by_key[("i", li)]
        w, b = params["inner"][li]
        put(d, np.transpose(np.asarray(w), (2, 1, 0)), np.asarray(b))
    return jnp.asarray(slab)


@jax.jit
def kpi_encoder_forward(ts, slab):
    """ts[i]: (B, var_nums[i], window) float32, slab: prepacked weights.

    Returns (B, window, HIDDEN_SIZE) float32.
    """
    B, L = ts[0].shape[0], ts[0].shape[2]
    # roll+mask causality relies on rows being whole contiguous windows per batch element
    assert L == WINDOW
    for t, v in zip(ts, VAR_NUMS):
        assert t.shape == (B, v, WINDOW)
    assert slab.shape == (SLAB_ROWS, SLAB_COLS)

    # channels-last per group, channel-concat across groups, batch folded into the sublane dim
    x = jnp.concatenate(
        [jnp.transpose(t, (0, 2, 1)).astype(jnp.float32) for t in ts], axis=-1
    ).reshape(B * L, C_IN)

    # No grid: single un-pipelined invocation, everything VMEM-resident (<< 1 MiB total).
    # TODO(synk): once B*L is large, switch to a "parallel" row-block grid (block rows a
    #             multiple of WINDOW) for v7x's second TensorCore + a lane-dense output layout.
    out2d = pl.pallas_call(
        kpi_kernel,
        out_shape=jax.ShapeDtypeStruct((B * L, HIDDEN_SIZE), jnp.float32),
        in_specs=[pl.BlockSpec(memory_space=pltpu.MemorySpace.VMEM),
                  pl.BlockSpec(memory_space=pltpu.MemorySpace.VMEM)],
        out_specs=pl.BlockSpec(memory_space=pltpu.MemorySpace.VMEM),
    )(x, slab)
    return out2d.reshape(B, L, HIDDEN_SIZE)


# ------------------------------- deterministic parameter init --------------------------------
def _conv_init(key, cin, cout, k):
    bound = 1.0 / math.sqrt(cin * k)   # matches torch.nn.Conv1d default U(-sqrt(1/fan_in), ...)
    kw, kb = jax.random.split(key)
    w = jax.random.uniform(kw, (cout, cin, k), jnp.float32, -bound, bound)
    b = jax.random.uniform(kb, (cout,), jnp.float32, -bound, bound)
    return (w, b)


def init_params(key):
    params = {"temporal": [], "inner": []}
    for var in VAR_NUMS:
        layers = []
        cin = var
        for cout, k in zip(T_HIDDEN, T_KERNELS):
            key, sub = jax.random.split(key)
            layers.append(_conv_init(sub, cin, cout, k))
            cin = cout
        params["temporal"].append(layers)
    cin = GROUP_NUM * TEMPORAL_DIM
    i_hidden = list(I_HIDDEN)
    i_hidden[-1] = HIDDEN_SIZE
    for cout, k in zip(i_hidden, I_KERNELS):
        key, sub = jax.random.split(key)
        params["inner"].append(_conv_init(sub, cin, cout, k))
        cin = cout
    return params


# ------------------------------------ pure-JAX reference -------------------------------------
def reference_forward(ts, params):
    def causal_conv(x, w, b, dil):  # x: (B, Cin, L), w: (Cout, Cin, K)
        kk = w.shape[2]
        pad = (kk - 1) * dil
        y = lax.conv_general_dilated(
            x, w, window_strides=(1,), padding=[(pad, 0)], rhs_dilation=(dil,),
            dimension_numbers=("NCH", "OIH", "NCH"))
        return y + b[None, :, None]

    encs = []
    for g, t in enumerate(ts):
        h = t.astype(jnp.float32)                                   # (B, var_g, L)
        for li, (w, b) in enumerate(params["temporal"][g]):
            h = jnp.maximum(causal_conv(h, w, b, DILATION ** li), 0.0)
        h = jnp.transpose(h, (0, 2, 1))                             # (B, L, C)
        encs.append(jnp.max(h, axis=-1, keepdims=True))             # MaxPool1d(C) -> (B, L, 1)
    z = jnp.transpose(jnp.concatenate(encs, axis=-1), (0, 2, 1))    # (B, group_num, L)
    for li, (w, b) in enumerate(params["inner"]):
        z = jnp.maximum(causal_conv(z, w, b, DILATION ** li), 0.0)
    return jnp.transpose(z, (0, 2, 1))                              # (B, L, HIDDEN_SIZE)


# ------------------------------------------ main ---------------------------------------------
if __name__ == "__main__":
    key = jax.random.PRNGKey(0)
    k_params, k0, k1 = jax.random.split(key, 3)
    params = init_params(k_params)
    slab = build_weight_slab(params)        # packed ONCE; reused by every forward call

    ts = [
        jax.random.normal(k0, (BATCH, VAR_NUMS[0], WINDOW), jnp.float32),
        jax.random.normal(k1, (BATCH, VAR_NUMS[1], WINDOW), jnp.float32),
    ]

    out = kpi_encoder_forward(ts, slab)
    out = jax.block_until_ready(out)
    assert out.shape == (BATCH, WINDOW, HIDDEN_SIZE), out.shape

    # second call reuses the jitted executable + cached slab (no host repacking / re-upload)
    out = jax.block_until_ready(kpi_encoder_forward(ts, slab))

    ref = jax.block_until_ready(reference_forward(ts, params))
    np.testing.assert_allclose(np.asarray(out), np.asarray(ref), rtol=1e-4, atol=1e-4)

    print("KERNEL_OK")
</pallas_src>

<mosaic_0001>
module attributes {stable_mosaic.version = 11 : i64} {
  func.func @kpi_kernel(%arg0: memref<32x8xf32, #tpu.memory_space<vmem>>, %arg1: memref<56x128xf32, #tpu.memory_space<vmem>>, %arg2: memref<32x32xf32, #tpu.memory_space<vmem>>) attributes {dimension_semantics = [], scalar_prefetch = 0 : i64, scratch_operands = 0 : i64, tpu.core_type = #tpu.core_type<tc>} {
    %c0 = arith.constant 0 : index
    %c0_0 = arith.constant 0 : index
    %0 = vector.load %arg0[%c0, %c0_0] : memref<32x8xf32, #tpu.memory_space<vmem>>, vector<32x8xf32>
    %1 = tpu.iota {dimensions = array<i32: 0>} : vector<32x1xi32>
    %c16_i32 = arith.constant 16 : i32
    %c0_i32 = arith.constant 0 : i32
    %2 = arith.cmpi eq, %c16_i32, %c0_i32 : i32
    %c1_i32 = arith.constant 1 : i32
    %3 = arith.select %2, %c1_i32, %c16_i32 : i32
    %4 = vector.broadcast %3 : i32 to vector<32x1xi32>
    %5 = arith.remsi %1, %4 : vector<32x1xi32>
    %c0_i32_1 = arith.constant 0 : i32
    %6 = vector.broadcast %c0_i32_1 : i32 to vector<32x1xi32>
    %7 = arith.cmpi ne, %5, %6 : vector<32x1xi32>
    %c0_i32_2 = arith.constant 0 : i32
    %8 = vector.broadcast %c0_i32_2 : i32 to vector<32x1xi32>
    %9 = arith.cmpi slt, %5, %8 : vector<32x1xi32>
    %c0_i32_3 = arith.constant 0 : i32
    %10 = arith.cmpi slt, %3, %c0_i32_3 : i32
    %11 = vector.broadcast %10 : i1 to vector<32x1xi1>
    %12 = vector.broadcast %11 : vector<32x1xi1> to vector<32x1xi1>
    %13 = arith.xori %9, %12 : vector<32x1xi1>
    %14 = arith.andi %13, %7 : vector<32x1xi1>
    %15 = vector.broadcast %3 : i32 to vector<32x1xi32>
    %16 = arith.addi %5, %15 : vector<32x1xi32>
    %17 = arith.select %14, %16, %5 : vector<32x1xi1>, vector<32x1xi32>
    %c1_i32_4 = arith.constant 1 : i32
    %18 = vector.broadcast %c1_i32_4 : i32 to vector<32x1xi32>
    %19 = arith.cmpi sge, %17, %18 : vector<32x1xi32>
    %c2_i32 = arith.constant 2 : i32
    %20 = vector.broadcast %c2_i32 : i32 to vector<32x1xi32>
    %21 = arith.cmpi sge, %17, %20 : vector<32x1xi32>
    %c4_i32 = arith.constant 4 : i32
    %22 = vector.broadcast %c4_i32 : i32 to vector<32x1xi32>
    %23 = arith.cmpi sge, %17, %22 : vector<32x1xi32>
    %c2_i32_5 = arith.constant 2 : i32
    %24 = tpu.dynamic_rotate %0 by %c2_i32_5 dim 0 : vector<32x8xf32>, i32 -> vector<32x8xf32>
    %cst = arith.constant 0.000000e+00 : f32
    %25 = vector.shape_cast %21 : vector<32x1xi1> to vector<32x1xi1>
    %26 = vector.broadcast %25 : vector<32x1xi1> to vector<32x8xi1>
    %27 = vector.broadcast %cst : f32 to vector<32x8xf32>
    %28 = arith.select %26, %24, %27 : vector<32x8xi1>, vector<32x8xf32>
    %c1_i32_6 = arith.constant 1 : i32
    %29 = tpu.dynamic_rotate %0 by %c1_i32_6 dim 0 : vector<32x8xf32>, i32 -> vector<32x8xf32>
    %cst_7 = arith.constant 0.000000e+00 : f32
    %30 = vector.shape_cast %19 : vector<32x1xi1> to vector<32x1xi1>
    %31 = vector.broadcast %30 : vector<32x1xi1> to vector<32x8xi1>
    %32 = vector.broadcast %cst_7 : f32 to vector<32x8xf32>
    %33 = arith.select %31, %29, %32 : vector<32x8xi1>, vector<32x8xf32>
    %34 = tpu.concatenate %28, %33, %0 in 1 : vector<32x8xf32>, vector<32x8xf32>, vector<32x8xf32> -> vector<32x24xf32>
    %c0_8 = arith.constant 0 : index
    %c0_9 = arith.constant 0 : index
    %35 = vector.load %arg1[%c0_8, %c0_9] : memref<56x128xf32, #tpu.memory_space<vmem>>, vector<24x16xf32>
    %c48 = arith.constant 48 : index
    %c0_10 = arith.constant 0 : index
    %36 = vector.load %arg1[%c48, %c0_10] : memref<56x128xf32, #tpu.memory_space<vmem>>, vector<1x16xf32>
    %cst_11 = arith.constant dense<0.000000e+00> : vector<32x16xf32>
    %37 = tpu.matmul %34, %35, %cst_11 {dimension_numbers = #tpu.dot_dimension_numbers<[1], [0], [0], [1], [0, 0, 1, 1], [], []>} : vector<32x24xf32>, vector<24x16xf32>, vector<32x16xf32> -> vector<32x16xf32>
    %38 = vector.broadcast %36 : vector<1x16xf32> to vector<32x16xf32>
    %39 = arith.addf %37, %38 : vector<32x16xf32>
    %cst_12 = arith.constant 0.000000e+00 : f32
    %40 = vector.broadcast %cst_12 : f32 to vector<32x16xf32>
    %41 = arith.maximumf %39, %40 : vector<32x16xf32>
    %c4_i32_13 = arith.constant 4 : i32
    %42 = tpu.dynamic_rotate %41 by %c4_i32_13 dim 0 : vector<32x16xf32>, i32 -> vector<32x16xf32>
    %cst_14 = arith.constant 0.000000e+00 : f32
    %43 = vector.shape_cast %23 : vector<32x1xi1> to vector<32x1xi1>
    %44 = vector.broadcast %43 : vector<32x1xi1> to vector<32x16xi1>
    %45 = vector.broadcast %cst_14 : f32 to vector<32x16xf32>
    %46 = arith.select %44, %42, %45 : vector<32x16xi1>, vector<32x16xf32>
    %c2_i32_15 = arith.constant 2 : i32
    %47 = tpu.dynamic_rotate %41 by %c2_i32_15 dim 0 : vector<32x16xf32>, i32 -> vector<32x16xf32>
    %cst_16 = arith.constant 0.000000e+00 : f32
    %48 = vector.shape_cast %21 : vector<32x1xi1> to vector<32x1xi1>
    %49 = vector.broadcast %48 : vector<32x1xi1> to vector<32x16xi1>
    %50 = vector.broadcast %cst_16 : f32 to vector<32x16xf32>
    %51 = arith.select %49, %47, %50 : vector<32x16xi1>, vector<32x16xf32>
    %52 = tpu.concatenate %46, %51, %41 in 1 : vector<32x16xf32>, vector<32x16xf32>, vector<32x16xf32> -> vector<32x48xf32>
    %c0_17 = arith.constant 0 : index
    %c16 = arith.constant 16 : index
    %53 = vector.load %arg1[%c0_17, %c16] : memref<56x128xf32, #tpu.memory_space<vmem>>, vector<48x16xf32>
    %c48_18 = arith.constant 48 : index
    %c16_19 = arith.constant 16 : index
    %54 = vector.load %arg1[%c48_18, %c16_19] : memref<56x128xf32, #tpu.memory_space<vmem>>, vector<1x16xf32>
    %cst_20 = arith.constant dense<0.000000e+00> : vector<32x16xf32>
    %55 = tpu.matmul %52, %53, %cst_20 {dimension_numbers = #tpu.dot_dimension_numbers<[1], [0], [0], [1], [0, 0, 1, 1], [], []>} : vector<32x48xf32>, vector<48x16xf32>, vector<32x16xf32> -> vector<32x16xf32>
    %56 = vector.broadcast %54 : vector<1x16xf32> to vector<32x16xf32>
    %57 = arith.addf %55, %56 : vector<32x16xf32>
    %cst_21 = arith.constant 0.000000e+00 : f32
    %58 = vector.broadcast %cst_21 : f32 to vector<32x16xf32>
    %59 = arith.maximumf %57, %58 : vector<32x16xf32>
    %60 = vector.extract_strided_slice %59 {offsets = [0, 0], sizes = [32, 8], strides = [1, 1]} : vector<32x16xf32> to vector<32x8xf32>
    %cst_22 = arith.constant dense<0xFF800000> : vector<32xf32>
    %61 = vector.multi_reduction <maximumf>, %60, %cst_22 [1] : vector<32x8xf32> to vector<32xf32>
    %62 = vector.shape_cast %61 : vector<32xf32> to vector<32x1xf32>
    %63 = vector.extract_strided_slice %59 {offsets = [0, 8], sizes = [32, 8], strides = [1, 1]} : vector<32x16xf32> to vector<32x8xf32>
    %cst_23 = arith.constant dense<0xFF800000> : vector<32xf32>
    %64 = vector.multi_reduction <maximumf>, %63, %cst_23 [1] : vector<32x8xf32> to vector<32xf32>
    %65 = vector.shape_cast %64 : vector<32xf32> to vector<32x1xf32>
    %cst_24 = arith.constant 0.000000e+00 : f32
    %66 = vector.broadcast %cst_24 : f32 to vector<32x6xf32>
    %67 = tpu.concatenate %62, %65, %66 in 1 : vector<32x1xf32>, vector<32x1xf32>, vector<32x6xf32> -> vector<32x8xf32>
    %c2_i32_25 = arith.constant 2 : i32
    %68 = tpu.dynamic_rotate %67 by %c2_i32_25 dim 0 : vector<32x8xf32>, i32 -> vector<32x8xf32>
    %cst_26 = arith.constant 0.000000e+00 : f32
    %69 = vector.shape_cast %21 : vector<32x1xi1> to vector<32x1xi1>
    %70 = vector.broadcast %69 : vector<32x1xi1> to vector<32x8xi1>
    %71 = vector.broadcast %cst_26 : f32 to vector<32x8xf32>
    %72 = arith.select %70, %68, %71 : vector<32x8xi1>, vector<32x8xf32>
    %c1_i32_27 = arith.constant 1 : i32
    %73 = tpu.dynamic_rotate %67 by %c1_i32_27 dim 0 : vector<32x8xf32>, i32 -> vector<32x8xf32>
    %cst_28 = arith.constant 0.000000e+00 : f32
    %74 = vector.shape_cast %19 : vector<32x1xi1> to vector<32x1xi1>
    %75 = vector.broadcast %74 : vector<32x1xi1> to vector<32x8xi1>
    %76 = vector.broadcast %cst_28 : f32 to vector<32x8xf32>
    %77 = arith.select %75, %73, %76 : vector<32x8xi1>, vector<32x8xf32>
    %78 = tpu.concatenate %72, %77, %67 in 1 : vector<32x8xf32>, vector<32x8xf32>, vector<32x8xf32> -> vector<32x24xf32>
    %c0_29 = arith.constant 0 : index
    %c32 = arith.constant 32 : index
    %79 = vector.load %arg1[%c0_29, %c32] : memref<56x128xf32, #tpu.memory_space<vmem>>, vector<24x16xf32>
    %c48_30 = arith.constant 48 : index
    %c32_31 = arith.constant 32 : index
    %80 = vector.load %arg1[%c48_30, %c32_31] : memref<56x128xf32, #tpu.memory_space<vmem>>, vector<1x16xf32>
    %cst_32 = arith.constant dense<0.000000e+00> : vector<32x16xf32>
    %81 = tpu.matmul %78, %79, %cst_32 {dimension_numbers = #tpu.dot_dimension_numbers<[1], [0], [0], [1], [0, 0, 1, 1], [], []>} : vector<32x24xf32>, vector<24x16xf32>, vector<32x16xf32> -> vector<32x16xf32>
    %82 = vector.broadcast %80 : vector<1x16xf32> to vector<32x16xf32>
    %83 = arith.addf %81, %82 : vector<32x16xf32>
    %cst_33 = arith.constant 0.000000e+00 : f32
    %84 = vector.broadcast %cst_33 : f32 to vector<32x16xf32>
    %85 = arith.maximumf %83, %84 : vector<32x16xf32>
    %c4_i32_34 = arith.constant 4 : i32
    %86 = tpu.dynamic_rotate %85 by %c4_i32_34 dim 0 : vector<32x16xf32>, i32 -> vector<32x16xf32>
    %cst_35 = arith.constant 0.000000e+00 : f32
    %87 = vector.shape_cast %23 : vector<32x1xi1> to vector<32x1xi1>
    %88 = vector.broadcast %87 : vector<32x1xi1> to vector<32x16xi1>
    %89 = vector.broadcast %cst_35 : f32 to vector<32x16xf32>
    %90 = arith.select %88, %86, %89 : vector<32x16xi1>, vector<32x16xf32>
    %c2_i32_36 = arith.constant 2 : i32
    %91 = tpu.dynamic_rotate %85 by %c2_i32_36 dim 0 : vector<32x16xf32>, i32 -> vector<32x16xf32>
    %cst_37 = arith.constant 0.000000e+00 : f32
    %92 = vector.shape_cast %21 : vector<32x1xi1> to vector<32x1xi1>
    %93 = vector.broadcast %92 : vector<32x1xi1> to vector<32x16xi1>
    %94 = vector.broadcast %cst_37 : f32 to vector<32x16xf32>
    %95 = arith.select %93, %91, %94 : vector<32x16xi1>, vector<32x16xf32>
    %96 = tpu.concatenate %90, %95, %85 in 1 : vector<32x16xf32>, vector<32x16xf32>, vector<32x16xf32> -> vector<32x48xf32>
    %c0_38 = arith.constant 0 : index
    %c48_39 = arith.constant 48 : index
    %97 = vector.load %arg1[%c0_38, %c48_39] : memref<56x128xf32, #tpu.memory_space<vmem>>, vector<48x32xf32>
    %c48_40 = arith.constant 48 : index
    %c48_41 = arith.constant 48 : index
    %98 = vector.load %arg1[%c48_40, %c48_41] : memref<56x128xf32, #tpu.memory_space<vmem>>, vector<1x32xf32>
    %cst_42 = arith.constant dense<0.000000e+00> : vector<32x32xf32>
    %99 = tpu.matmul %96, %97, %cst_42 {dimension_numbers = #tpu.dot_dimension_numbers<[1], [0], [0], [1], [0, 0, 1, 1], [], []>} : vector<32x48xf32>, vector<48x32xf32>, vector<32x32xf32> -> vector<32x32xf32>
    %100 = vector.broadcast %98 : vector<1x32xf32> to vector<32x32xf32>
    %101 = arith.addf %99, %100 : vector<32x32xf32>
    %cst_43 = arith.constant 0.000000e+00 : f32
    %102 = vector.broadcast %cst_43 : f32 to vector<32x32xf32>
    %103 = arith.maximumf %101, %102 : vector<32x32xf32>
    %c0_44 = arith.constant 0 : index
    %c0_45 = arith.constant 0 : index
    %104 = vector.load %arg2[%c0_44, %c0_45] : memref<32x32xf32, #tpu.memory_space<vmem>>, vector<32x32xf32>
    tpu.vector_store %arg2[%c0_44, %c0_45], %103 {strides = array<i32>} : memref<32x32xf32, #tpu.memory_space<vmem>>, vector<32x32xf32>,
    return
  }
}

</mosaic_0001>

<llo_original>
// kernel: kpi_encoder_forward.1
$region0: #{kpi_encoder_forward.1}
  #allocation0 [shape = 'u32[]', space=smem, size = 0x4, offset = 0x4, fixed_abs, tag = 'smem constant byte address 0x4 - core index']
  #allocation1 [shape = 'u32[144,128]{1,0:T(1,128)}', space=vmem, size = 0x12000, scoped, tag = 'internal scratch']
  %s0 = inlined_call_operand.vmem [shape: f32[32,8], index: 0, kind: input, shape index: {}]
  %s1 = inlined_call_operand.vmem [shape: f32[56,128], index: 1, kind: input, shape index: {}]
  %s2 = inlined_call_operand.hbm [shape: f32[32,32], index: 2, kind: output, shape index: {}]
  %s3 = sld [smem:[#allocation0]]
  $region18: #{kpi_encoder_forward.1} parent=0
    _
  %s5 = ssub.s32 1, %s3
  %s6 = scalar_select 0, %s5, %s3
  $region1: #{kpi_encoder_forward.1} parent=0
    #allocation2 [shape = 'u8[16384]{0}', space=vmem, size = 0x4000, scoped, tag = 'output window, operand 0, single buffered']
    #allocation3 [shape = 's32[1]{0}', space=sflag, size = 0x4, scoped, tag = 'scoped memory for kpi_encoder_forward.1']
    %7 = vsyncpa [#allocation3], 0
    // Predicated region
    $region2: #{kpi_encoder_forward.1} parent=1 // pred_check
      _
    $region3: #{kpi_encoder_forward.1} parent=1 // pred_check_branch
      %9 = sbr.rel (0) target = $region5
    $region4: #{kpi_encoder_forward.1} parent=1 // pred_region
      _
    $region5: #{kpi_encoder_forward.1} parent=1 // pred_fallthru
      _
    // Predicated region
    $region6: #{kpi_encoder_forward.1} parent=1 // pred_check
      _
    $region7: #{kpi_encoder_forward.1} parent=1 // pred_check_branch
      %11 = sbr.rel (0) target = $region9
    $region8: #{kpi_encoder_forward.1} parent=1 // pred_region
      _
    $region9: #{kpi_encoder_forward.1} parent=1 // pred_fallthru
      _
    %v12 = vld [vmem:[%s0] sm:$0xff]
    %v13 = vld [vmem:[%s0 + $0x8] sm:$0xff]
    %v14 = vld [vmem:[%s0 + $0x10] sm:$0xff]
    %v15 = vld [vmem:[%s0 + $0x18] sm:$0xff]
    %v16 = vlaneseq
    %v17 = vshrl.u32 %v16, 7
    %v18 = vadd.s32 %v17, 8
    %v19 = vadd.s32 %v17, 16
    %v20 = vadd.s32 %v17, 24
    %vm21 = vcmp.lt.s32.totalorder %v17, 0
    %v22 = vsub.s32 0, %v17
    %v23 = vsel %vm21, %v22, %v17
    %v24 = vshrl.u32 %v23, 4
    %v25 = vand.u32 %v23, 15
    %v26 = vsub.s32 0, %v25
    %v27 = vsel %vm21, %v26, %v25
    %vm28 = vcmp.lt.s32.totalorder %v18, 0
    %v29 = vsub.s32 0, %v18
    %v30 = vsel %vm28, %v29, %v18
    %v31 = vshrl.u32 %v30, 4
    %v32 = vand.u32 %v30, 15
    %v33 = vsub.s32 0, %v32
    %v34 = vsel %vm28, %v33, %v32
    %vm35 = vcmp.lt.s32.totalorder %v19, 0
    %v36 = vsub.s32 0, %v19
    %v37 = vsel %vm35, %v36, %v19
    %v38 = vshrl.u32 %v37, 4
    %v39 = vand.u32 %v37, 15
    %v40 = vsub.s32 0, %v39
    %v41 = vsel %vm35, %v40, %v39
    %vm42 = vcmp.lt.s32.totalorder %v20, 0
    %v43 = vsub.s32 0, %v20
    %v44 = vsel %vm42, %v43, %v20
    %v45 = vshrl.u32 %v44, 4
    %v46 = vand.u32 %v44, 15
    %v47 = vsub.s32 0, %v46
    %v48 = vsel %vm42, %v47, %v46
    %vm49 = vcmp.ne.s32.totalorder %v27, 0
    %vm50 = vcmp.ne.s32.totalorder %v34, 0
    %vm51 = vcmp.ne.s32.totalorder %v41, 0
    %vm52 = vcmp.ne.s32.totalorder %v48, 0
    %vm53 = vcmp.lt.s32.totalorder %v27, 0
    %vm54 = vcmp.lt.s32.totalorder %v34, 0
    %vm55 = vcmp.lt.s32.totalorder %v41, 0
    %vm56 = vcmp.lt.s32.totalorder %v48, 0
    %vm57 = vmand %vm53, %vm49
    %vm58 = vmand %vm54, %vm50
    %vm59 = vmand %vm55, %vm51
    %vm60 = vmand %vm56, %vm52
    %v61 = vadd.s32 %v27, 16
    %v62 = vadd.s32 %v34, 16
    %v63 = vadd.s32 %v41, 16
    %v64 = vadd.s32 %v48, 16
    %v65 = vsel %vm57, %v61, %v27
    %v66 = vsel %vm58, %v62, %v34
    %v67 = vsel %vm59, %v63, %v41
    %v68 = vsel %vm60, %v64, %v48
    %vm69 = vcmp.ge.s32.totalorder %v65, 1
    %vm70 = vcmp.ge.s32.totalorder %v66, 1
    %vm71 = vcmp.ge.s32.totalorder %v67, 1
    %vm72 = vcmp.ge.s32.totalorder %v68, 1
    %vm73 = vcmp.ge.s32.totalorder %v65, 2
    %vm74 = vcmp.ge.s32.totalorder %v66, 2
    %vm75 = vcmp.ge.s32.totalorder %v67, 2
    %vm76 = vcmp.ge.s32.totalorder %v68, 2
    %vm77 = vcmp.ge.s32.totalorder %v65, 4
    %vm78 = vcmp.ge.s32.totalorder %v66, 4
    %vm79 = vcmp.ge.s32.totalorder %v67, 4
    %vm80 = vcmp.ge.s32.totalorder %v68, 4
    %v81 = vrot.slane %v12, 6
    %v82 = vrot.slane %v13, 6
    %v83 = vrot.slane %v14, 6
    %v84 = vrot.slane %v15, 6
    %vm85 = vcmp.lt.s32.totalorder %v17, 2
    %v86 = vsel %vm85, %v83, %v84
    %v87 = vsel %vm85, %v82, %v83
    %v88 = vsel %vm85, %v81, %v82
    %v89 = vsel %vm85, %v84, %v81
    %v90 = vsel %vm73, 1, 0
    %v91 = vsel %vm74, 1, 0
    %v92 = vsel %vm75, 1, 0
    %v93 = vsel %vm76, 1, 0
    %vm94 = vcmp.eq.s32.totalorder %v90, 1
    %vm95 = vcmp.eq.s32.totalorder %v91, 1
    %vm96 = vcmp.eq.s32.totalorder %v92, 1
    %vm97 = vcmp.eq.s32.totalorder %v93, 1
    %v98 = vsel %vm94, %v89, 0.0
    %v99 = vsel %vm95, %v88, 0.0
    %v100 = vsel %vm96, %v87, 0.0
    %v101 = vsel %vm97, %v86, 0.0
    %v102 = vrot.slane %v12, 7
    %v103 = vrot.slane %v13, 7
    %v104 = vrot.slane %v14, 7
    %v105 = vrot.slane %v15, 7
    %vm106 = vcmp.lt.s32.totalorder %v17, 1
    %v107 = vsel %vm106, %v104, %v105
    %v108 = vsel %vm106, %v103, %v104
    %v109 = vsel %vm106, %v102, %v103
    %v110 = vsel %vm106, %v105, %v102
    %v111 = vsel %vm69, 1, 0
    %v112 = vsel %vm70, 1, 0
    %v113 = vsel %vm71, 1, 0
    %v114 = vsel %vm72, 1, 0
    %vm115 = vcmp.eq.s32.totalorder %v111, 1
    %vm116 = vcmp.eq.s32.totalorder %v112, 1
    %vm117 = vcmp.eq.s32.totalorder %v113, 1
    %vm118 = vcmp.eq.s32.totalorder %v114, 1
    %v119 = vsel %vm115, %v110, 0.0
    %v120 = vsel %vm116, %v109, 0.0
    %v121 = vsel %vm117, %v108, 0.0
    %v122 = vsel %vm118, %v107, 0.0
    %127 = vrot.lane.b32.xlu0 %v119, 8
    %v128 = vpop.permute.xlu0 %127
    %129 = vrot.lane.b32.xlu0 %v120, 8
    %v130 = vpop.permute.xlu0 %129
    %131 = vrot.lane.b32.xlu0 %v121, 8
    %v132 = vpop.permute.xlu0 %131
    %133 = vrot.lane.b32.xlu0 %v122, 8
    %v134 = vpop.permute.xlu0 %133
    %143 = vrot.lane.b32.xlu0 %v12, 16
    %v144 = vpop.permute.xlu0 %143
    %145 = vrot.lane.b32.xlu0 %v13, 16
    %v146 = vpop.permute.xlu0 %145
    %147 = vrot.lane.b32.xlu0 %v14, 16
    %v148 = vpop.permute.xlu0 %147
    %149 = vrot.lane.b32.xlu0 %v15, 16
    %v150 = vpop.permute.xlu0 %149
    %vm155 = vcmask 64512
    %v156 = vsel %vm155, %v98, %v128
    %v157 = vsel %vm155, %v99, %v130
    %v158 = vsel %vm155, %v100, %v132
    %v159 = vsel %vm155, %v101, %v134
    %vm160 = vcmask 130048
    %v161 = vsel %vm160, %v156, %v144
    %v162 = vsel %vm160, %v157, %v146
    %v163 = vsel %vm160, %v158, %v148
    %v164 = vsel %vm160, %v159, %v150
    %v165 = vld [vmem:[%s1] sm:$0xff]
    %v166 = vld [vmem:[%s1 + $0x8] sm:$0xff]
    %v167 = vld [vmem:[%s1 + $0x10] sm:$0xff]
    %v168 = vld [vmem:[%s1 + $0x30] sm:$0x1]
    %v169 = vlaneseq
    %v170 = vshrl.u32 %v169, 7
    %v171 = vsub.s32 0, %v170
    %v172 = vrot.slane %v168, %v171
    %vm173 = vcmask 195584
    %v175 = vsel %vm173, %v161, 0
    %v178 = vsel %vm173, %v162, 0
    %v181 = vsel %vm173, %v163, 0
    %v184 = vsel %vm173, %v164, 0
    %186 = vmatprep.subr.mxu0 0.0
    %187 = vmatpush1.msra.mxu0 %v165
    %188 = vmatprep.subr.mxu0 0.0
    %189 = vmatpush1.msra.mxu0 %v166
    %190 = vmatprep.subr.mxu0 0.0
    %191 = vmatpush1.msra.mxu0 %v167
    %192 = vmatprep.subr.mxu0 0.0
    %193 = vmatpush1.msra.mxu0 0.0
    %194 = vmatprep.subr.mxu0 0.0
    %195 = vmatpush1.msra.mxu0 0.0
    %196 = vmatprep.subr.mxu0 0.0
    %197 = vmatpush1.msra.mxu0 0.0
    %198 = vmatprep.subr.mxu0 0.0
    %199 = vmatpush1.msra.mxu0 0.0
    %200 = vmatprep.subr.mxu0 0.0
    %201 = vmatpush1.msra.mxu0 0.0
    %202 = vmatprep.subr.mxu0 0.0
    %203 = vmatpush1.msra.mxu0 0.0
    %204 = vmatprep.subr.mxu0 0.0
    %205 = vmatpush1.msra.mxu0 0.0
    %206 = vmatprep.subr.mxu0 0.0
    %207 = vmatpush1.msra.mxu0 0.0
    %208 = vmatprep.subr.mxu0 0.0
    %209 = vmatpush1.msra.mxu0 0.0
    %210 = vmatprep.subr.mxu0 0.0
    %211 = vmatpush1.msra.mxu0 0.0
    %212 = vmatprep.subr.mxu0 0.0
    %213 = vmatpush1.msra.mxu0 0.0
    %214 = vmatprep.subr.mxu0 0.0
    %215 = vmatpush1.msra.mxu0 0.0
    %216 = vmatprep.subr.mxu0 0.0
    %217 = vmatpush1.msra.mxu0 0.0
    %218 = vmatprep.subr.mxu0 0.0
    %219 = vmatpush1.msra.mxu0 0.0
    %220 = vmatprep.subr.mxu0 0.0
    %221 = vmatpush1.msra.mxu0 0.0
    %222 = vmatprep.subr.mxu0 0.0
    %223 = vmatpush1.msra.mxu0 0.0
    %224 = vmatprep.subr.mxu0 0.0
    %225 = vmatpush1.msra.mxu0 0.0
    %226 = vmatprep.subr.mxu0 0.0
    %227 = vmatpush1.msra.mxu0 0.0
    %228 = vmatprep.subr.mxu0 0.0
    %229 = vmatpush1.msra.mxu0 0.0
    %230 = vmatprep.subr.mxu0 0.0
    %231 = vmatpush1.msra.mxu0 0.0
    %232 = vmatprep.subr.mxu0 0.0
    %233 = vmatpush1.msra.mxu0 0.0
    %234 = vmatprep.subr.mxu0 0.0
    %235 = vmatpush1.msra.mxu0 0.0
    %236 = vmatprep.subr.mxu0 0.0
    %237 = vmatpush1.msra.mxu0 0.0
    %238 = vmatprep.subr.mxu0 0.0
    %239 = vmatpush1.msra.mxu0 0.0
    %240 = vmatprep.subr.mxu0 0.0
    %241 = vmatpush1.msra.mxu0 0.0
    %242 = vmatprep.subr.mxu0 0.0
    %243 = vmatpush1.msra.mxu0 0.0
    %244 = vmatprep.subr.mxu0 0.0
    %245 = vmatpush1.msra.mxu0 0.0
    %246 = vmatprep.subr.mxu0 0.0
    %247 = vmatpush1.msra.mxu0 0.0
    %248 = vmatprep.subr.mxu0 0.0
    %249 = vmatpush1.msra.mxu0 0.0
    %250 = vmatprep.mubr.f32.mxu0 0.0
    %251 = vmatmul.mubr.f32.gmra.mrb[0].mxu0 %v175
    %v252 = vpop.f32.mrb[0].mxu0
    %v253 = vadd.f32 %v172, %v252
    %v254 = vpop.f32.mrb[0].mxu0
    %255 = vmatprep.mubr.f32.mxu0 0.0
    %256 = vmatmul.mubr.f32.gmra.mrb[0].mxu0 %v178
    %v257 = vpop.f32.mrb[0].mxu0
    %v258 = vadd.f32 %v172, %v257
    %v259 = vpop.f32.mrb[0].mxu0
    %260 = vmatprep.mubr.f32.mxu0 0.0
    %261 = vmatmul.mubr.f32.gmra.mrb[0].mxu0 %v181
    %v262 = vpop.f32.mrb[0].mxu0
    %v263 = vadd.f32 %v172, %v262
    %v264 = vpop.f32.mrb[0].mxu0
    %265 = vmatprep.mubr.f32.mxu0 0.0
    %266 = vmatmul.mubr.f32.gmra.mrb[0].mxu0 %v184
    %v267 = vpop.f32.mrb[0].mxu0
    %v268 = vadd.f32 %v172, %v267
    %v269 = vpop.f32.mrb[0].mxu0
    %270 = vdwg.mxu0
    %v271 = vmax.f32 %v253, 0.0
    %v272 = vmax.f32 %v258, 0.0
    %v273 = vmax.f32 %v263, 0.0
    %v274 = vmax.f32 %v268, 0.0
    %v275 = vrot.slane %v271, 4
    %v276 = vrot.slane %v272, 4
    %v277 = vrot.slane %v273, 4
    %v278 = vrot.slane %v274, 4
    %vm279 = vcmp.lt.s32.totalorder %v17, 4
    %v280 = vsel %vm279, %v277, %v278
    %v281 = vsel %vm279, %v276, %v277
    %v282 = vsel %vm279, %v275, %v276
    %v283 = vsel %vm279, %v278, %v275
    %v284 = vsel %vm77, 1, 0
    %v285 = vsel %vm78, 1, 0
    %v286 = vsel %vm79, 1, 0
    %v287 = vsel %vm80, 1, 0
    %vm288 = vcmp.eq.s32.totalorder %v284, 1
    %vm289 = vcmp.eq.s32.totalorder %v285, 1
    %vm290 = vcmp.eq.s32.totalorder %v286, 1
    %vm291 = vcmp.eq.s32.totalorder %v287, 1
    %v292 = vsel %vm288, %v283, 0.0
    %v293 = vsel %vm289, %v282, 0.0
    %v294 = vsel %vm290, %v281, 0.0
    %v295 = vsel %vm291, %v280, 0.0
    %v296 = vrot.slane %v271, 6
    %v297 = vrot.slane %v272, 6
    %v298 = vrot.slane %v273, 6
    %v299 = vrot.slane %v274, 6
    %v300 = vsel %vm85, %v298, %v299
    %v301 = vsel %vm85, %v297, %v298
    %v302 = vsel %vm85, %v296, %v297
    %v303 = vsel %vm85, %v299, %v296
    %v304 = vsel %vm94, %v303, 0.0
    %v305 = vsel %vm95, %v302, 0.0
    %v306 = vsel %vm96, %v301, 0.0
    %v307 = vsel %vm97, %v300, 0.0
    %312 = vrot.lane.b32.xlu0 %v304, 16
    %v313 = vpop.permute.xlu0 %312
    %314 = vrot.lane.b32.xlu0 %v305, 16
    %v315 = vpop.permute.xlu0 %314
    %316 = vrot.lane.b32.xlu0 %v306, 16
    %v317 = vpop.permute.xlu0 %316
    %318 = vrot.lane.b32.xlu0 %v307, 16
    %v319 = vpop.permute.xlu0 %318
    %328 = vrot.lane.b32.xlu0 %v271, 32
    %v329 = vpop.permute.xlu0 %328
    %330 = vrot.lane.b32.xlu0 %v272, 32
    %v331 = vpop.permute.xlu0 %330
    %332 = vrot.lane.b32.xlu0 %v273, 32
    %v333 = vpop.permute.xlu0 %332
    %334 = vrot.lane.b32.xlu0 %v274, 32
    %v335 = vpop.permute.xlu0 %334
    %v340 = vsel %vm160, %v292, %v313
    %v341 = vsel %vm160, %v293, %v315
    %v342 = vsel %vm160, %v294, %v317
    %v343 = vsel %vm160, %v295, %v319
    %vm344 = vcmask 261120
    %v345 = vsel %vm344, %v340, %v329
    %v346 = vsel %vm344, %v341, %v331
    %v347 = vsel %vm344, %v342, %v333
    %v348 = vsel %vm344, %v343, %v335
    %v349 = vld [vmem:[%s1] sm:$0xff]
    %v350 = vld [vmem:[%s1 + $0x8] sm:$0xff]
    %v351 = vld [vmem:[%s1 + $0x10] sm:$0xff]
    %v352 = vld [vmem:[%s1 + $0x18] sm:$0xff]
    %v353 = vld [vmem:[%s1 + $0x20] sm:$0xff]
    %v354 = vld [vmem:[%s1 + $0x28] sm:$0xff]
    %361 = vrot.lane.b32.xlu0 %v349, 112
    %v362 = vpop.permute.xlu0 %361
    %363 = vrot.lane.b32.xlu0 %v350, 112
    %v364 = vpop.permute.xlu0 %363
    %365 = vrot.lane.b32.xlu0 %v351, 112
    %v366 = vpop.permute.xlu0 %365
    %367 = vrot.lane.b32.xlu0 %v352, 112
    %v368 = vpop.permute.xlu0 %367
    %369 = vrot.lane.b32.xlu0 %v353, 112
    %v370 = vpop.permute.xlu0 %369
    %371 = vrot.lane.b32.xlu0 %v354, 112
    %v372 = vpop.permute.xlu0 %371
    %380 = vrot.lane.b32.xlu0 %v172, 112
    %v381 = vpop.permute.xlu0 %380
    %vm383 = vcmask 392192
    %v385 = vsel %vm383, %v345, 0
    %v388 = vsel %vm383, %v346, 0
    %v391 = vsel %vm383, %v347, 0
    %v394 = vsel %vm383, %v348, 0
    %396 = vmatprep.subr.mxu0 0.0
    %397 = vmatpush1.msra.mxu0 %v362
    %398 = vmatprep.subr.mxu0 0.0
    %399 = vmatpush1.msra.mxu0 %v364
    %400 = vmatprep.subr.mxu0 0.0
    %401 = vmatpush1.msra.mxu0 %v366
    %402 = vmatprep.subr.mxu0 0.0
    %403 = vmatpush1.msra.mxu0 %v368
    %404 = vmatprep.subr.mxu0 0.0
    %405 = vmatpush1.msra.mxu0 %v370
    %406 = vmatprep.subr.mxu0 0.0
    %407 = vmatpush1.msra.mxu0 %v372
    %408 = vmatprep.subr.mxu0 0.0
    %409 = vmatpush1.msra.mxu0 0.0
    %410 = vmatprep.subr.mxu0 0.0
    %411 = vmatpush1.msra.mxu0 0.0
    %412 = vmatprep.subr.mxu0 0.0
    %413 = vmatpush1.msra.mxu0 0.0
    %414 = vmatprep.subr.mxu0 0.0
    %415 = vmatpush1.msra.mxu0 0.0
    %416 = vmatprep.subr.mxu0 0.0
    %417 = vmatpush1.msra.mxu0 0.0
    %418 = vmatprep.subr.mxu0 0.0
    %419 = vmatpush1.msra.mxu0 0.0
    %420 = vmatprep.subr.mxu0 0.0
    %421 = vmatpush1.msra.mxu0 0.0
    %422 = vmatprep.subr.mxu0 0.0
    %423 = vmatpush1.msra.mxu0 0.0
    %424 = vmatprep.subr.mxu0 0.0
    %425 = vmatpush1.msra.mxu0 0.0
    %426 = vmatprep.subr.mxu0 0.0
    %427 = vmatpush1.msra.mxu0 0.0
    %428 = vmatprep.subr.mxu0 0.0
    %429 = vmatpush1.msra.mxu0 0.0
    %430 = vmatprep.subr.mxu0 0.0
    %431 = vmatpush1.msra.mxu0 0.0
    %432 = vmatprep.subr.mxu0 0.0
    %433 = vmatpush1.msra.mxu0 0.0
    %434 = vmatprep.subr.mxu0 0.0
    %435 = vmatpush1.msra.mxu0 0.0
    %436 = vmatprep.subr.mxu0 0.0
    %437 = vmatpush1.msra.mxu0 0.0
    %438 = vmatprep.subr.mxu0 0.0
    %439 = vmatpush1.msra.mxu0 0.0
    %440 = vmatprep.subr.mxu0 0.0
    %441 = vmatpush1.msra.mxu0 0.0
    %442 = vmatprep.subr.mxu0 0.0
    %443 = vmatpush1.msra.mxu0 0.0
    %444 = vmatprep.subr.mxu0 0.0
    %445 = vmatpush1.msra.mxu0 0.0
    %446 = vmatprep.subr.mxu0 0.0
    %447 = vmatpush1.msra.mxu0 0.0
    %448 = vmatprep.subr.mxu0 0.0
    %449 = vmatpush1.msra.mxu0 0.0
    %450 = vmatprep.subr.mxu0 0.0
    %451 = vmatpush1.msra.mxu0 0.0
    %452 = vmatprep.subr.mxu0 0.0
    %453 = vmatpush1.msra.mxu0 0.0
    %454 = vmatprep.subr.mxu0 0.0
    %455 = vmatpush1.msra.mxu0 0.0
    %456 = vmatprep.subr.mxu0 0.0
    %457 = vmatpush1.msra.mxu0 0.0
    %458 = vmatprep.subr.mxu0 0.0
    %459 = vmatpush1.msra.mxu0 0.0
    %460 = vmatprep.mubr.f32.mxu0 0.0
    %461 = vmatmul.mubr.f32.gmra.mrb[0].mxu0 %v385
    %v462 = vpop.f32.mrb[0].mxu0
    %v463 = vadd.f32 %v381, %v462
    %v464 = vpop.f32.mrb[0].mxu0
    %465 = vmatprep.mubr.f32.mxu0 0.0
    %466 = vmatmul.mubr.f32.gmra.mrb[0].mxu0 %v388
    %v467 = vpop.f32.mrb[0].mxu0
    %v468 = vadd.f32 %v381, %v467
    %v469 = vpop.f32.mrb[0].mxu0
    %470 = vmatprep.mubr.f32.mxu0 0.0
    %471 = vmatmul.mubr.f32.gmra.mrb[0].mxu0 %v391
    %v472 = vpop.f32.mrb[0].mxu0
    %v473 = vadd.f32 %v381, %v472
    %v474 = vpop.f32.mrb[0].mxu0
    %475 = vmatprep.mubr.f32.mxu0 0.0
    %476 = vmatmul.mubr.f32.gmra.mrb[0].mxu0 %v394
    %v477 = vpop.f32.mrb[0].mxu0
    %v478 = vadd.f32 %v381, %v477
    %v479 = vpop.f32.mrb[0].mxu0
    %480 = vdwg.mxu0
    %v481 = vmax.f32 %v463, 0.0
    %v482 = vmax.f32 %v468, 0.0
    %v483 = vmax.f32 %v473, 0.0
    %v484 = vmax.f32 %v478, 0.0
    %v485 = vsel %vm155, %v481, -inf
    %486 = vmax.xlane.f32.xlu0 %v485
    %v487 = vpop.xlane.xlu0 %486
    %v488 = vsel %vm155, %v482, -inf
    %489 = vmax.xlane.f32.xlu0 %v488
    %v490 = vpop.xlane.xlu0 %489
    %v491 = vsel %vm155, %v483, -inf
    %492 = vmax.xlane.f32.xlu0 %v491
    %v493 = vpop.xlane.xlu0 %492
    %v494 = vsel %vm155, %v484, -inf
    %495 = vmax.xlane.f32.xlu0 %v494
    %v496 = vpop.xlane.xlu0 %495
    %vm497 = vcmask 130112
    %v498 = vsel %vm497, %v481, -inf
    %499 = vmax.xlane.f32.xlu0 %v498
    %v500 = vpop.xlane.xlu0 %499
    %v501 = vsel %vm497, %v482, -inf
    %502 = vmax.xlane.f32.xlu0 %v501
    %v503 = vpop.xlane.xlu0 %502
    %v504 = vsel %vm497, %v483, -inf
    %505 = vmax.xlane.f32.xlu0 %v504
    %v506 = vpop.xlane.xlu0 %505
    %v507 = vsel %vm497, %v484, -inf
    %508 = vmax.xlane.f32.xlu0 %v507
    %v509 = vpop.xlane.xlu0 %508
    %vm510 = vcmask 7168
    %v511 = vsel %vm510, %v487, %v500
    %v512 = vsel %vm510, %v490, %v503
    %v513 = vsel %vm510, %v493, %v506
    %v514 = vsel %vm510, %v496, %v509
    %vm515 = vcmask 15360
    %v516 = vsel %vm515, %v511, 0.0
    %v517 = vsel %vm515, %v512, 0.0
    %v518 = vsel %vm515, %v513, 0.0
    %v519 = vsel %vm515, %v514, 0.0
    %v520 = vrot.slane %v516, 6
    %v521 = vrot.slane %v517, 6
    %v522 = vrot.slane %v518, 6
    %v523 = vrot.slane %v519, 6
    %v524 = vsel %vm85, %v522, %v523
    %v525 = vsel %vm85, %v521, %v522
    %v526 = vsel %vm85, %v520, %v521
    %v527 = vsel %vm85, %v523, %v520
    %v528 = vsel %vm94, %v527, 0.0
    %v529 = vsel %vm95, %v526, 0.0
    %v530 = vsel %vm96, %v525, 0.0
    %v531 = vsel %vm97, %v524, 0.0
    %v532 = vrot.slane %v516, 7
    %v533 = vrot.slane %v517, 7
    %v534 = vrot.slane %v518, 7
    %v535 = vrot.slane %v519, 7
    %v536 = vsel %vm106, %v534, %v535
    %v537 = vsel %vm106, %v533, %v534
    %v538 = vsel %vm106, %v532, %v533
    %v539 = vsel %vm106, %v535, %v532
    %v540 = vsel %vm115, %v539, 0.0
    %v541 = vsel %vm116, %v538, 0.0
    %v542 = vsel %vm117, %v537, 0.0
    %v543 = vsel %vm118, %v536, 0.0
    %548 = vrot.lane.b32.xlu0 %v540, 8
    %v549 = vpop.permute.xlu0 %548
    %550 = vrot.lane.b32.xlu0 %v541, 8
    %v551 = vpop.permute.xlu0 %550
    %552 = vrot.lane.b32.xlu0 %v542, 8
    %v553 = vpop.permute.xlu0 %552
    %554 = vrot.lane.b32.xlu0 %v543, 8
    %v555 = vpop.permute.xlu0 %554
    %564 = vrot.lane.b32.xlu0 %v516, 16
    %v565 = vpop.permute.xlu0 %564
    %566 = vrot.lane.b32.xlu0 %v517, 16
    %v567 = vpop.permute.xlu0 %566
    %568 = vrot.lane.b32.xlu0 %v518, 16
    %v569 = vpop.permute.xlu0 %568
    %570 = vrot.lane.b32.xlu0 %v519, 16
    %v571 = vpop.permute.xlu0 %570
    %v576 = vsel %vm155, %v528, %v549
    %v577 = vsel %vm155, %v529, %v551
    %v578 = vsel %vm155, %v530, %v553
    %v579 = vsel %vm155, %v531, %v555
    %v580 = vsel %vm160, %v576, %v565
    %v581 = vsel %vm160, %v577, %v567
    %v582 = vsel %vm160, %v578, %v569
    %v583 = vsel %vm160, %v579, %v571
    %587 = vrot.lane.b32.xlu0 %v165, 96
    %v588 = vpop.permute.xlu0 %587
    %589 = vrot.lane.b32.xlu0 %v166, 96
    %v590 = vpop.permute.xlu0 %589
    %591 = vrot.lane.b32.xlu0 %v167, 96
    %v592 = vpop.permute.xlu0 %591
    %596 = vrot.lane.b32.xlu0 %v172, 96
    %v597 = vpop.permute.xlu0 %596
    %v600 = vsel %vm173, %v580, 0
    %v603 = vsel %vm173, %v581, 0
    %v606 = vsel %vm173, %v582, 0
    %v609 = vsel %vm173, %v583, 0
    %611 = vmatprep.subr.mxu0 0.0
    %612 = vmatpush1.msra.mxu0 %v588
    %613 = vmatprep.subr.mxu0 0.0
    %614 = vmatpush1.msra.mxu0 %v590
    %615 = vmatprep.subr.mxu0 0.0
    %616 = vmatpush1.msra.mxu0 %v592
    %617 = vmatprep.subr.mxu0 0.0
    %618 = vmatpush1.msra.mxu0 0.0
    %619 = vmatprep.subr.mxu0 0.0
    %620 = vmatpush1.msra.mxu0 0.0
    %621 = vmatprep.subr.mxu0 0.0
    %622 = vmatpush1.msra.mxu0 0.0
    %623 = vmatprep.subr.mxu0 0.0
    %624 = vmatpush1.msra.mxu0 0.0
    %625 = vmatprep.subr.mxu0 0.0
    %626 = vmatpush1.msra.mxu0 0.0
    %627 = vmatprep.subr.mxu0 0.0
    %628 = vmatpush1.msra.mxu0 0.0
    %629 = vmatprep.subr.mxu0 0.0
    %630 = vmatpush1.msra.mxu0 0.0
    %631 = vmatprep.subr.mxu0 0.0
    %632 = vmatpush1.msra.mxu0 0.0
    %633 = vmatprep.subr.mxu0 0.0
    %634 = vmatpush1.msra.mxu0 0.0
    %635 = vmatprep.subr.mxu0 0.0
    %636 = vmatpush1.msra.mxu0 0.0
    %637 = vmatprep.subr.mxu0 0.0
    %638 = vmatpush1.msra.mxu0 0.0
    %639 = vmatprep.subr.mxu0 0.0
    %640 = vmatpush1.msra.mxu0 0.0
    %641 = vmatprep.subr.mxu0 0.0
    %642 = vmatpush1.msra.mxu0 0.0
    %643 = vmatprep.subr.mxu0 0.0
    %644 = vmatpush1.msra.mxu0 0.0
    %645 = vmatprep.subr.mxu0 0.0
    %646 = vmatpush1.msra.mxu0 0.0
    %647 = vmatprep.subr.mxu0 0.0
    %648 = vmatpush1.msra.mxu0 0.0
    %649 = vmatprep.subr.mxu0 0.0
    %650 = vmatpush1.msra.mxu0 0.0
    %651 = vmatprep.subr.mxu0 0.0
    %652 = vmatpush1.msra.mxu0 0.0
    %653 = vmatprep.subr.mxu0 0.0
    %654 = vmatpush1.msra.mxu0 0.0
    %655 = vmatprep.subr.mxu0 0.0
    %656 = vmatpush1.msra.mxu0 0.0
    %657 = vmatprep.subr.mxu0 0.0
    %658 = vmatpush1.msra.mxu0 0.0
    %659 = vmatprep.subr.mxu0 0.0
    %660 = vmatpush1.msra.mxu0 0.0
    %661 = vmatprep.subr.mxu0 0.0
    %662 = vmatpush1.msra.mxu0 0.0
    %663 = vmatprep.subr.mxu0 0.0
    %664 = vmatpush1.msra.mxu0 0.0
    %665 = vmatprep.subr.mxu0 0.0
    %666 = vmatpush1.msra.mxu0 0.0
    %667 = vmatprep.subr.mxu0 0.0
    %668 = vmatpush1.msra.mxu0 0.0
    %669 = vmatprep.subr.mxu0 0.0
    %670 = vmatpush1.msra.mxu0 0.0
    %671 = vmatprep.subr.mxu0 0.0
    %672 = vmatpush1.msra.mxu0 0.0
    %673 = vmatprep.subr.mxu0 0.0
    %674 = vmatpush1.msra.mxu0 0.0
    %675 = vmatprep.mubr.f32.mxu0 0.0
    %676 = vmatmul.mubr.f32.gmra.mrb[0].mxu0 %v600
    %v677 = vpop.f32.mrb[0].mxu0
    %v678 = vadd.f32 %v597, %v677
    %v679 = vpop.f32.mrb[0].mxu0
    %680 = vmatprep.mubr.f32.mxu0 0.0
    %681 = vmatmul.mubr.f32.gmra.mrb[0].mxu0 %v603
    %v682 = vpop.f32.mrb[0].mxu0
    %v683 = vadd.f32 %v597, %v682
    %v684 = vpop.f32.mrb[0].mxu0
    %685 = vmatprep.mubr.f32.mxu0 0.0
    %686 = vmatmul.mubr.f32.gmra.mrb[0].mxu0 %v606
    %v687 = vpop.f32.mrb[0].mxu0
    %v688 = vadd.f32 %v597, %v687
    %v689 = vpop.f32.mrb[0].mxu0
    %690 = vmatprep.mubr.f32.mxu0 0.0
    %691 = vmatmul.mubr.f32.gmra.mrb[0].mxu0 %v609
    %v692 = vpop.f32.mrb[0].mxu0
    %v693 = vadd.f32 %v597, %v692
    %v694 = vpop.f32.mrb[0].mxu0
    %695 = vdwg.mxu0
    %v696 = vmax.f32 %v678, 0.0
    %v697 = vmax.f32 %v683, 0.0
    %v698 = vmax.f32 %v688, 0.0
    %v699 = vmax.f32 %v693, 0.0
    %v700 = vrot.slane %v696, 4
    %v701 = vrot.slane %v697, 4
    %v702 = vrot.slane %v698, 4
    %v703 = vrot.slane %v699, 4
    %v704 = vsel %vm279, %v702, %v703
    %v705 = vsel %vm279, %v701, %v702
    %v706 = vsel %vm279, %v700, %v701
    %v707 = vsel %vm279, %v703, %v700
    %v708 = vsel %vm288, %v707, 0.0
    %v709 = vsel %vm289, %v706, 0.0
    %v710 = vsel %vm290, %v705, 0.0
    %v711 = vsel %vm291, %v704, 0.0
    %v712 = vrot.slane %v696, 6
    %v713 = vrot.slane %v697, 6
    %v714 = vrot.slane %v698, 6
    %v715 = vrot.slane %v699, 6
    %v716 = vsel %vm85, %v714, %v715
    %v717 = vsel %vm85, %v713, %v714
    %v718 = vsel %vm85, %v712, %v713
    %v719 = vsel %vm85, %v715, %v712
    %v720 = vsel %vm94, %v719, 0.0
    %v721 = vsel %vm95, %v718, 0.0
    %v722 = vsel %vm96, %v717, 0.0
    %v723 = vsel %vm97, %v716, 0.0
    %728 = vrot.lane.b32.xlu0 %v720, 16
    %v729 = vpop.permute.xlu0 %728
    %730 = vrot.lane.b32.xlu0 %v721, 16
    %v731 = vpop.permute.xlu0 %730
    %732 = vrot.lane.b32.xlu0 %v722, 16
    %v733 = vpop.permute.xlu0 %732
    %734 = vrot.lane.b32.xlu0 %v723, 16
    %v735 = vpop.permute.xlu0 %734
    %744 = vrot.lane.b32.xlu0 %v696, 32
    %v745 = vpop.permute.xlu0 %744
    %746 = vrot.lane.b32.xlu0 %v697, 32
    %v747 = vpop.permute.xlu0 %746
    %748 = vrot.lane.b32.xlu0 %v698, 32
    %v749 = vpop.permute.xlu0 %748
    %750 = vrot.lane.b32.xlu0 %v699, 32
    %v751 = vpop.permute.xlu0 %750
    %v756 = vsel %vm160, %v708, %v729
    %v757 = vsel %vm160, %v709, %v731
    %v758 = vsel %vm160, %v710, %v733
    %v759 = vsel %vm160, %v711, %v735
    %v760 = vsel %vm344, %v756, %v745
    %v761 = vsel %vm344, %v757, %v747
    %v762 = vsel %vm344, %v758, %v749
    %v763 = vsel %vm344, %v759, %v751
    %764 = vrot.lane.b32.xlu0 %v349, 80
    %v765 = vpop.permute.xlu0 %764
    %766 = vrot.lane.b32.xlu0 %v350, 80
    %v767 = vpop.permute.xlu0 %766
    %768 = vrot.lane.b32.xlu0 %v351, 80
    %v769 = vpop.permute.xlu0 %768
    %770 = vrot.lane.b32.xlu0 %v352, 80
    %v771 = vpop.permute.xlu0 %770
    %772 = vrot.lane.b32.xlu0 %v353, 80
    %v773 = vpop.permute.xlu0 %772
    %774 = vrot.lane.b32.xlu0 %v354, 80
    %v775 = vpop.permute.xlu0 %774
    %782 = vrot.lane.b32.xlu0 %v172, 80
    %v783 = vpop.permute.xlu0 %782
    %v786 = vsel %vm383, %v760, 0
    %v789 = vsel %vm383, %v761, 0
    %v792 = vsel %vm383, %v762, 0
    %v795 = vsel %vm383, %v763, 0
    %797 = vmatprep.subr.mxu0 0.0
    %798 = vmatpush1.msra.mxu0 %v765
    %799 = vmatprep.subr.mxu0 0.0
    %800 = vmatpush1.msra.mxu0 %v767
    %801 = vmatprep.subr.mxu0 0.0
    %802 = vmatpush1.msra.mxu0 %v769
    %803 = vmatprep.subr.mxu0 0.0
    %804 = vmatpush1.msra.mxu0 %v771
    %805 = vmatprep.subr.mxu0 0.0
    %806 = vmatpush1.msra.mxu0 %v773
    %807 = vmatprep.subr.mxu0 0.0
    %808 = vmatpush1.msra.mxu0 %v775
    %809 = vmatprep.subr.mxu0 0.0
    %810 = vmatpush1.msra.mxu0 0.0
    %811 = vmatprep.subr.mxu0 0.0
    %812 = vmatpush1.msra.mxu0 0.0
    %813 = vmatprep.subr.mxu0 0.0
    %814 = vmatpush1.msra.mxu0 0.0
    %815 = vmatprep.subr.mxu0 0.0
    %816 = vmatpush1.msra.mxu0 0.0
    %817 = vmatprep.subr.mxu0 0.0
    %818 = vmatpush1.msra.mxu0 0.0
    %819 = vmatprep.subr.mxu0 0.0
    %820 = vmatpush1.msra.mxu0 0.0
    %821 = vmatprep.subr.mxu0 0.0
    %822 = vmatpush1.msra.mxu0 0.0
    %823 = vmatprep.subr.mxu0 0.0
    %824 = vmatpush1.msra.mxu0 0.0
    %825 = vmatprep.subr.mxu0 0.0
    %826 = vmatpush1.msra.mxu0 0.0
    %827 = vmatprep.subr.mxu0 0.0
    %828 = vmatpush1.msra.mxu0 0.0
    %829 = vmatprep.subr.mxu0 0.0
    %830 = vmatpush1.msra.mxu0 0.0
    %831 = vmatprep.subr.mxu0 0.0
    %832 = vmatpush1.msra.mxu0 0.0
    %833 = vmatprep.subr.mxu0 0.0
    %834 = vmatpush1.msra.mxu0 0.0
    %835 = vmatprep.subr.mxu0 0.0
    %836 = vmatpush1.msra.mxu0 0.0
    %837 = vmatprep.subr.mxu0 0.0
    %838 = vmatpush1.msra.mxu0 0.0
    %839 = vmatprep.subr.mxu0 0.0
    %840 = vmatpush1.msra.mxu0 0.0
    %841 = vmatprep.subr.mxu0 0.0
    %842 = vmatpush1.msra.mxu0 0.0
    %843 = vmatprep.subr.mxu0 0.0
    %844 = vmatpush1.msra.mxu0 0.0
    %845 = vmatprep.subr.mxu0 0.0
    %846 = vmatpush1.msra.mxu0 0.0
    %847 = vmatprep.subr.mxu0 0.0
    %848 = vmatpush1.msra.mxu0 0.0
    %849 = vmatprep.subr.mxu0 0.0
    %850 = vmatpush1.msra.mxu0 0.0
    %851 = vmatprep.subr.mxu0 0.0
    %852 = vmatpush1.msra.mxu0 0.0
    %853 = vmatprep.subr.mxu0 0.0
    %854 = vmatpush1.msra.mxu0 0.0
    %855 = vmatprep.subr.mxu0 0.0
    %856 = vmatpush1.msra.mxu0 0.0
    %857 = vmatprep.subr.mxu0 0.0
    %858 = vmatpush1.msra.mxu0 0.0
    %859 = vmatprep.subr.mxu0 0.0
    %860 = vmatpush1.msra.mxu0 0.0
    %861 = vmatprep.mubr.f32.mxu0 0.0
    %862 = vmatmul.mubr.f32.gmra.mrb[0].mxu0 %v786
    %v863 = vpop.f32.mrb[0].mxu0
    %v864 = vadd.f32 %v783, %v863
    %v865 = vpop.f32.mrb[0].mxu0
    %866 = vmatprep.mubr.f32.mxu0 0.0
    %867 = vmatmul.mubr.f32.gmra.mrb[0].mxu0 %v789
    %v868 = vpop.f32.mrb[0].mxu0
    %v869 = vadd.f32 %v783, %v868
    %v870 = vpop.f32.mrb[0].mxu0
    %871 = vmatprep.mubr.f32.mxu0 0.0
    %872 = vmatmul.mubr.f32.gmra.mrb[0].mxu0 %v792
    %v873 = vpop.f32.mrb[0].mxu0
    %v874 = vadd.f32 %v783, %v873
    %v875 = vpop.f32.mrb[0].mxu0
    %876 = vmatprep.mubr.f32.mxu0 0.0
    %877 = vmatmul.mubr.f32.gmra.mrb[0].mxu0 %v795
    %v878 = vpop.f32.mrb[0].mxu0
    %v879 = vadd.f32 %v783, %v878
    %v880 = vpop.f32.mrb[0].mxu0
    %881 = vdwg.mxu0
    %v882 = vmax.f32 %v864, 0.0
    %v883 = vmax.f32 %v869, 0.0
    %v884 = vmax.f32 %v874, 0.0
    %v885 = vmax.f32 %v879, 0.0
    %886 = vst.msk [vmem:[#allocation2] sm:$0xff] %vm344, %v882
    %887 = vst.msk [vmem:[#allocation2 + $0x8] sm:$0xff] %vm344, %v883
    %888 = vst.msk [vmem:[#allocation2 + $0x10] sm:$0xff] %vm344, %v884
    %889 = vst.msk [vmem:[#allocation2 + $0x18] sm:$0xff] %vm344, %v885
    // Predicated region
    $region10: #{kpi_encoder_forward.1} parent=1 // pred_check
      _
    $region11: #{kpi_encoder_forward.1} parent=1 // pred_check_branch
      %891 = sbr.rel (0) target = $region13
    $region12: #{kpi_encoder_forward.1} parent=1 // pred_region
      %s893 = ssub.s32 512, 512
      %894 = vsyncadd [#allocation3], %s893
      %s895 = sshll.u32 [#allocation2], 4
      %s896 = int_to_ptr.vmem [resolvable:$true] %s895
      %901 = dma.vmem_to_hbm [thread:$0]  %s896, 512, %s2, [#allocation3], 128, 128, 8
    $region13: #{kpi_encoder_forward.1} parent=1 // pred_fallthru
      _
    // Predicated region
    $region14: #{kpi_encoder_forward.1} parent=1 // pred_check
      _
    $region15: #{kpi_encoder_forward.1} parent=1 // pred_check_branch
      %903 = sbr.rel (0) target = $region17
    $region16: #{kpi_encoder_forward.1} parent=1 // pred_region
      %904 = dma.done [#allocation3], 512
    $region17: #{kpi_encoder_forward.1} parent=1 // pred_fallthru
      _
    %905 = vsyncpa [#allocation3], 1

</llo_original>
